<compile_context>
chip_gen: v6e
topology: v6e:2x2x1
jax: 0.10.0
libtpu: 0.0.40
codegen_flags: <defaults>
</compile_context>

<pallas_src>
import functools

import jax
import jax.numpy as jnp
from jax.experimental import pallas as pl
from jax.experimental.pallas import tpu as pltpu

BS = 4  # block_size; the PyTorch module asserts block_size == 4


def _s2d_kernel(x_ref, o_ref, tr_ref, *, cb_ho, wo):
    """One (batch n, channel-chunk cc) grid step.

    x_ref : (Cb*H, W)        row r = (cb*Ho + ho)*4 + bh, lane w = wo*4 + bw
    o_ref : (16, Cb*Ho, Wo)  slot q = bh*4 + bw, rows (cb, ho), lanes wo
    tr_ref: (W, Cb*Ho)       scratch: one bh phase with w moved onto sublanes
    """
    for bh in range(BS):                                    # static unroll (4)
        # Sublane-strided load: rows bh, bh+4, ... = all (cb, ho) rows of this
        # bh phase.  Done by the load unit (no XLU work, no extra DMA).
        xs = x_ref[pl.ds(bh, cb_ho, stride=BS), :]          # (Cb*Ho, W)
        # Move w onto sublanes so the stride-4 bw de-interleave becomes a
        # cheap sublane-strided slice (lane-strided loads do not lower).
        tr_ref[...] = jnp.transpose(xs)                     # (W, Cb*Ho)   XLU
        for bw in range(BS):                                # static unroll (4)
            s = tr_ref[pl.ds(bw, wo, stride=BS), :]         # (Wo, Cb*Ho)
            o_ref[bh * BS + bw, :, :] = jnp.transpose(s)    # (Cb*Ho, Wo)  XLU


def space_to_depth_module(x, *, vmem_budget_bytes=24 << 20, min_grid_steps=8,
                          min_slab_bytes=512 << 10):
    """Pallas TPU implementation of SpaceToDepthModule (block_size=4).

    x: (N, C, H, W)  ->  (N, C*16, H//4, W//4), NCHW, same dtype, bit-exact.
    """
    N, C, H, W = x.shape
    assert H % BS == 0 and W % BS == 0
    Ho, Wo = H // BS, W // BS

    itemsize = jnp.dtype(x.dtype).itemsize
    sub = max(8, 32 // itemsize)            # sublane multiple for this dtype

    def rup(a, b):
        return -(-a // b) * b

    def pad_bytes(rows, lanes, lead=1):     # padded VMEM bytes of one buffer
        return lead * rup(rows, sub) * rup(lanes, 128) * itemsize

    def footprint(cb):                      # padded per-step VMEM footprint
        return (2 * pad_bytes(cb * H, W)                       # input  (x2 buf)
                + 2 * pad_bytes(cb * Ho, Wo, lead=BS * BS)     # output (x2 buf)
                + pad_bytes(W, cb * Ho))                       # transpose scratch

    # Largest channel chunk that fits the VMEM budget (keep blocks big on
    # v5e/v6e; chunk so v7x's 64 MiB VMEM double-buffers comfortably).
    divisors = [d for d in range(C, 0, -1) if C % d == 0]
    fitting = [d for d in divisors if footprint(d) <= vmem_budget_bytes] or [1]
    cb = fitting[0]
    # Optionally split further so v7x's two TensorCores get enough grid steps,
    # but never shrink the contiguous input slab below min_slab_bytes.
    if N * (C // cb) < min_grid_steps:
        for d in fitting[1:]:
            if d * H * W * itemsize < min_slab_bytes:
                break
            cb = d
            if N * (C // d) >= min_grid_steps:
                break
    cc = C // cb
    cb_ho = cb * Ho

    # Pure views (no data movement) of the NCHW input / output:
    #   input : (N, Cc, Cb*H, W)          element [n, cc, cb*H + h, w]
    #   output: (N, 16, Cc, Cb*Ho, Wo)    element [n, bh*4+bw, cc, cb*Ho+ho, wo]
    x_v = x.reshape(N, cc, cb * H, W)

    kernel = functools.partial(_s2d_kernel, cb_ho=cb_ho, wo=Wo)

    vmem_limit = int(min(96 << 20, max(footprint(cb) + (2 << 20), 8 << 20)))

    cost = pl.CostEstimate(
        flops=0,
        transcendentals=0,
        bytes_accessed=2 * N * C * H * W * itemsize,
    )

    out_v = pl.pallas_call(
        kernel,
        out_shape=jax.ShapeDtypeStruct((N, BS * BS, cc, cb_ho, Wo), x.dtype),
        grid_spec=pltpu.PrefetchScalarGridSpec(
            num_scalar_prefetch=0,
            grid=(N, cc),  # (batch, channel chunk) — disjoint outputs
            in_specs=[
                # One fully contiguous HBM burst per step (all 4 bh phases).
                pl.BlockSpec((None, None, cb * H, W),
                             lambda n, c: (n, c, 0, 0)),
            ],
            out_specs=pl.BlockSpec((None, BS * BS, None, cb_ho, Wo),
                                   lambda n, c: (n, 0, c, 0, 0)),
            scratch_shapes=[pltpu.VMEM((W, cb_ho), x.dtype)],
        ),
        compiler_params=pltpu.CompilerParams(
            dimension_semantics=("parallel", "parallel"),
            vmem_limit_bytes=vmem_limit,
        ),
        cost_estimate=cost,
    )(x_v)

    return out_v.reshape(N, BS * BS * C, Ho, Wo)


def _reference(x):
    """Pure-JAX reference matching the PyTorch forward exactly."""
    N, C, H, W = x.shape
    y = x.reshape(N, C, H // BS, BS, W // BS, BS)
    y = jnp.transpose(y, (0, 3, 5, 1, 2, 4))
    return y.reshape(N, C * BS * BS, H // BS, W // BS)


if __name__ == "__main__":
    key = jax.random.PRNGKey(0)
    x = jax.random.normal(key, (2, 4, 16, 16), dtype=jnp.float32)

    out = jax.block_until_ready(space_to_depth_module(x))
    ref = _reference(x)

    assert out.shape == (2, 4 * 16, 4, 4), out.shape
    assert out.dtype == x.dtype
    assert jnp.array_equal(out, ref), "mismatch vs reference"

    print("KERNEL_OK")
</pallas_src>

<mosaic_0001>
module attributes {stable_mosaic.version = 11 : i64} {
  func.func @_s2d_kernel(%arg0: i32, %arg1: i32, %arg2: memref<1x1x64x16xf32, #tpu.memory_space<vmem>>, %arg3: memref<1x16x1x16x4xf32, #tpu.memory_space<vmem>>, %arg4: memref<16x16xf32, #tpu.memory_space<vmem>>) attributes {dimension_semantics = [#tpu.dimension_semantics<parallel>, #tpu.dimension_semantics<parallel>], iteration_bounds = array<i64: 2, 1>, scalar_prefetch = 0 : i64, scratch_operands = 1 : i64, tpu.core_type = #tpu.core_type<tc>, window_params = [{transform_indices = @transform_0, window_bounds = array<i64: 1, 1, 64, 16>}, {transform_indices = @transform_1, window_bounds = array<i64: 1, 16, 1, 16, 4>}]} {
    %c0 = arith.constant 0 : index
    %c0_0 = arith.constant 0 : index
    %c0_1 = arith.constant 0 : index
    %c0_2 = arith.constant 0 : index
    %0 = tpu.strided_load %arg2[%c0, %c0_0, %c0_1, %c0_2] {strides = array<i32: 1, 1, 4, 1>} : memref<1x1x64x16xf32, #tpu.memory_space<vmem>>, vector<1x1x16x16xf32>
    %1 = vector.shape_cast %0 : vector<1x1x16x16xf32> to vector<16x16xf32>
    %2 = tpu.transpose %1, [1, 0] : vector<16x16xf32> -> vector<16x16xf32>
    %c0_3 = arith.constant 0 : index
    %c0_4 = arith.constant 0 : index
    %3 = vector.load %arg4[%c0_3, %c0_4] : memref<16x16xf32, #tpu.memory_space<vmem>>, vector<16x16xf32>
    tpu.vector_store %arg4[%c0_3, %c0_4], %2 {strides = array<i32>} : memref<16x16xf32, #tpu.memory_space<vmem>>, vector<16x16xf32>,
    %c0_5 = arith.constant 0 : index
    %c0_6 = arith.constant 0 : index
    %4 = tpu.strided_load %arg4[%c0_5, %c0_6] {strides = array<i32: 4, 1>} : memref<16x16xf32, #tpu.memory_space<vmem>>, vector<4x16xf32>
    %5 = tpu.transpose %4, [1, 0] : vector<4x16xf32> -> vector<16x4xf32>
    %c0_7 = arith.constant 0 : index
    %c0_8 = arith.constant 0 : index
    %c0_9 = arith.constant 0 : index
    %c0_10 = arith.constant 0 : index
    %c0_11 = arith.constant 0 : index
    %6 = vector.load %arg3[%c0_7, %c0_8, %c0_9, %c0_10, %c0_11] : memref<1x16x1x16x4xf32, #tpu.memory_space<vmem>>, vector<1x1x1x16x4xf32>
    %7 = vector.shape_cast %6 : vector<1x1x1x16x4xf32> to vector<16x4xf32>
    %8 = vector.shape_cast %5 : vector<16x4xf32> to vector<1x1x1x16x4xf32>
    tpu.vector_store %arg3[%c0_7, %c0_8, %c0_9, %c0_10, %c0_11], %8 {strides = array<i32>} : memref<1x16x1x16x4xf32, #tpu.memory_space<vmem>>, vector<1x1x1x16x4xf32>,
    %c1 = arith.constant 1 : index
    %c0_12 = arith.constant 0 : index
    %9 = tpu.strided_load %arg4[%c1, %c0_12] {strides = array<i32: 4, 1>} : memref<16x16xf32, #tpu.memory_space<vmem>>, vector<4x16xf32>
    %10 = tpu.transpose %9, [1, 0] : vector<4x16xf32> -> vector<16x4xf32>
    %c0_13 = arith.constant 0 : index
    %c1_14 = arith.constant 1 : index
    %c0_15 = arith.constant 0 : index
    %c0_16 = arith.constant 0 : index
    %c0_17 = arith.constant 0 : index
    %11 = vector.load %arg3[%c0_13, %c1_14, %c0_15, %c0_16, %c0_17] : memref<1x16x1x16x4xf32, #tpu.memory_space<vmem>>, vector<1x1x1x16x4xf32>
    %12 = vector.shape_cast %11 : vector<1x1x1x16x4xf32> to vector<16x4xf32>
    %13 = vector.shape_cast %10 : vector<16x4xf32> to vector<1x1x1x16x4xf32>
    tpu.vector_store %arg3[%c0_13, %c1_14, %c0_15, %c0_16, %c0_17], %13 {strides = array<i32>} : memref<1x16x1x16x4xf32, #tpu.memory_space<vmem>>, vector<1x1x1x16x4xf32>,
    %c2 = arith.constant 2 : index
    %c0_18 = arith.constant 0 : index
    %14 = tpu.strided_load %arg4[%c2, %c0_18] {strides = array<i32: 4, 1>} : memref<16x16xf32, #tpu.memory_space<vmem>>, vector<4x16xf32>
    %15 = tpu.transpose %14, [1, 0] : vector<4x16xf32> -> vector<16x4xf32>
    %c0_19 = arith.constant 0 : index
    %c2_20 = arith.constant 2 : index
    %c0_21 = arith.constant 0 : index
    %c0_22 = arith.constant 0 : index
    %c0_23 = arith.constant 0 : index
    %16 = vector.load %arg3[%c0_19, %c2_20, %c0_21, %c0_22, %c0_23] : memref<1x16x1x16x4xf32, #tpu.memory_space<vmem>>, vector<1x1x1x16x4xf32>
    %17 = vector.shape_cast %16 : vector<1x1x1x16x4xf32> to vector<16x4xf32>
    %18 = vector.shape_cast %15 : vector<16x4xf32> to vector<1x1x1x16x4xf32>
    tpu.vector_store %arg3[%c0_19, %c2_20, %c0_21, %c0_22, %c0_23], %18 {strides = array<i32>} : memref<1x16x1x16x4xf32, #tpu.memory_space<vmem>>, vector<1x1x1x16x4xf32>,
    %c3 = arith.constant 3 : index
    %c0_24 = arith.constant 0 : index
    %19 = tpu.strided_load %arg4[%c3, %c0_24] {strides = array<i32: 4, 1>} : memref<16x16xf32, #tpu.memory_space<vmem>>, vector<4x16xf32>
    %20 = tpu.transpose %19, [1, 0] : vector<4x16xf32> -> vector<16x4xf32>
    %c0_25 = arith.constant 0 : index
    %c3_26 = arith.constant 3 : index
    %c0_27 = arith.constant 0 : index
    %c0_28 = arith.constant 0 : index
    %c0_29 = arith.constant 0 : index
    %21 = vector.load %arg3[%c0_25, %c3_26, %c0_27, %c0_28, %c0_29] : memref<1x16x1x16x4xf32, #tpu.memory_space<vmem>>, vector<1x1x1x16x4xf32>
    %22 = vector.shape_cast %21 : vector<1x1x1x16x4xf32> to vector<16x4xf32>
    %23 = vector.shape_cast %20 : vector<16x4xf32> to vector<1x1x1x16x4xf32>
    tpu.vector_store %arg3[%c0_25, %c3_26, %c0_27, %c0_28, %c0_29], %23 {strides = array<i32>} : memref<1x16x1x16x4xf32, #tpu.memory_space<vmem>>, vector<1x1x1x16x4xf32>,
    %c0_30 = arith.constant 0 : index
    %c0_31 = arith.constant 0 : index
    %c1_32 = arith.constant 1 : index
    %c0_33 = arith.constant 0 : index
    %24 = tpu.strided_load %arg2[%c0_30, %c0_31, %c1_32, %c0_33] {strides = array<i32: 1, 1, 4, 1>} : memref<1x1x64x16xf32, #tpu.memory_space<vmem>>, vector<1x1x16x16xf32>
    %25 = vector.shape_cast %24 : vector<1x1x16x16xf32> to vector<16x16xf32>
    %26 = tpu.transpose %25, [1, 0] : vector<16x16xf32> -> vector<16x16xf32>
    %c0_34 = arith.constant 0 : index
    %c0_35 = arith.constant 0 : index
    %27 = vector.load %arg4[%c0_34, %c0_35] : memref<16x16xf32, #tpu.memory_space<vmem>>, vector<16x16xf32>
    tpu.vector_store %arg4[%c0_34, %c0_35], %26 {strides = array<i32>} : memref<16x16xf32, #tpu.memory_space<vmem>>, vector<16x16xf32>,
    %c0_36 = arith.constant 0 : index
    %c0_37 = arith.constant 0 : index
    %28 = tpu.strided_load %arg4[%c0_36, %c0_37] {strides = array<i32: 4, 1>} : memref<16x16xf32, #tpu.memory_space<vmem>>, vector<4x16xf32>
    %29 = tpu.transpose %28, [1, 0] : vector<4x16xf32> -> vector<16x4xf32>
    %c0_38 = arith.constant 0 : index
    %c4 = arith.constant 4 : index
    %c0_39 = arith.constant 0 : index
    %c0_40 = arith.constant 0 : index
    %c0_41 = arith.constant 0 : index
    %30 = vector.load %arg3[%c0_38, %c4, %c0_39, %c0_40, %c0_41] : memref<1x16x1x16x4xf32, #tpu.memory_space<vmem>>, vector<1x1x1x16x4xf32>
    %31 = vector.shape_cast %30 : vector<1x1x1x16x4xf32> to vector<16x4xf32>
    %32 = vector.shape_cast %29 : vector<16x4xf32> to vector<1x1x1x16x4xf32>
    tpu.vector_store %arg3[%c0_38, %c4, %c0_39, %c0_40, %c0_41], %32 {strides = array<i32>} : memref<1x16x1x16x4xf32, #tpu.memory_space<vmem>>, vector<1x1x1x16x4xf32>,
    %c1_42 = arith.constant 1 : index
    %c0_43 = arith.constant 0 : index
    %33 = tpu.strided_load %arg4[%c1_42, %c0_43] {strides = array<i32: 4, 1>} : memref<16x16xf32, #tpu.memory_space<vmem>>, vector<4x16xf32>
    %34 = tpu.transpose %33, [1, 0] : vector<4x16xf32> -> vector<16x4xf32>
    %c0_44 = arith.constant 0 : index
    %c5 = arith.constant 5 : index
    %c0_45 = arith.constant 0 : index
    %c0_46 = arith.constant 0 : index
    %c0_47 = arith.constant 0 : index
    %35 = vector.load %arg3[%c0_44, %c5, %c0_45, %c0_46, %c0_47] : memref<1x16x1x16x4xf32, #tpu.memory_space<vmem>>, vector<1x1x1x16x4xf32>
    %36 = vector.shape_cast %35 : vector<1x1x1x16x4xf32> to vector<16x4xf32>
    %37 = vector.shape_cast %34 : vector<16x4xf32> to vector<1x1x1x16x4xf32>
    tpu.vector_store %arg3[%c0_44, %c5, %c0_45, %c0_46, %c0_47], %37 {strides = array<i32>} : memref<1x16x1x16x4xf32, #tpu.memory_space<vmem>>, vector<1x1x1x16x4xf32>,
    %c2_48 = arith.constant 2 : index
    %c0_49 = arith.constant 0 : index
    %38 = tpu.strided_load %arg4[%c2_48, %c0_49] {strides = array<i32: 4, 1>} : memref<16x16xf32, #tpu.memory_space<vmem>>, vector<4x16xf32>
    %39 = tpu.transpose %38, [1, 0] : vector<4x16xf32> -> vector<16x4xf32>
    %c0_50 = arith.constant 0 : index
    %c6 = arith.constant 6 : index
    %c0_51 = arith.constant 0 : index
    %c0_52 = arith.constant 0 : index
    %c0_53 = arith.constant 0 : index
    %40 = vector.load %arg3[%c0_50, %c6, %c0_51, %c0_52, %c0_53] : memref<1x16x1x16x4xf32, #tpu.memory_space<vmem>>, vector<1x1x1x16x4xf32>
    %41 = vector.shape_cast %40 : vector<1x1x1x16x4xf32> to vector<16x4xf32>
    %42 = vector.shape_cast %39 : vector<16x4xf32> to vector<1x1x1x16x4xf32>
    tpu.vector_store %arg3[%c0_50, %c6, %c0_51, %c0_52, %c0_53], %42 {strides = array<i32>} : memref<1x16x1x16x4xf32, #tpu.memory_space<vmem>>, vector<1x1x1x16x4xf32>,
    %c3_54 = arith.constant 3 : index
    %c0_55 = arith.constant 0 : index
    %43 = tpu.strided_load %arg4[%c3_54, %c0_55] {strides = array<i32: 4, 1>} : memref<16x16xf32, #tpu.memory_space<vmem>>, vector<4x16xf32>
    %44 = tpu.transpose %43, [1, 0] : vector<4x16xf32> -> vector<16x4xf32>
    %c0_56 = arith.constant 0 : index
    %c7 = arith.constant 7 : index
    %c0_57 = arith.constant 0 : index
    %c0_58 = arith.constant 0 : index
    %c0_59 = arith.constant 0 : index
    %45 = vector.load %arg3[%c0_56, %c7, %c0_57, %c0_58, %c0_59] : memref<1x16x1x16x4xf32, #tpu.memory_space<vmem>>, vector<1x1x1x16x4xf32>
    %46 = vector.shape_cast %45 : vector<1x1x1x16x4xf32> to vector<16x4xf32>
    %47 = vector.shape_cast %44 : vector<16x4xf32> to vector<1x1x1x16x4xf32>
    tpu.vector_store %arg3[%c0_56, %c7, %c0_57, %c0_58, %c0_59], %47 {strides = array<i32>} : memref<1x16x1x16x4xf32, #tpu.memory_space<vmem>>, vector<1x1x1x16x4xf32>,
    %c0_60 = arith.constant 0 : index
    %c0_61 = arith.constant 0 : index
    %c2_62 = arith.constant 2 : index
    %c0_63 = arith.constant 0 : index
    %48 = tpu.strided_load %arg2[%c0_60, %c0_61, %c2_62, %c0_63] {strides = array<i32: 1, 1, 4, 1>} : memref<1x1x64x16xf32, #tpu.memory_space<vmem>>, vector<1x1x16x16xf32>
    %49 = vector.shape_cast %48 : vector<1x1x16x16xf32> to vector<16x16xf32>
    %50 = tpu.transpose %49, [1, 0] : vector<16x16xf32> -> vector<16x16xf32>
    %c0_64 = arith.constant 0 : index
    %c0_65 = arith.constant 0 : index
    %51 = vector.load %arg4[%c0_64, %c0_65] : memref<16x16xf32, #tpu.memory_space<vmem>>, vector<16x16xf32>
    tpu.vector_store %arg4[%c0_64, %c0_65], %50 {strides = array<i32>} : memref<16x16xf32, #tpu.memory_space<vmem>>, vector<16x16xf32>,
    %c0_66 = arith.constant 0 : index
    %c0_67 = arith.constant 0 : index
    %52 = tpu.strided_load %arg4[%c0_66, %c0_67] {strides = array<i32: 4, 1>} : memref<16x16xf32, #tpu.memory_space<vmem>>, vector<4x16xf32>
    %53 = tpu.transpose %52, [1, 0] : vector<4x16xf32> -> vector<16x4xf32>
    %c0_68 = arith.constant 0 : index
    %c8 = arith.constant 8 : index
    %c0_69 = arith.constant 0 : index
    %c0_70 = arith.constant 0 : index
    %c0_71 = arith.constant 0 : index
    %54 = vector.load %arg3[%c0_68, %c8, %c0_69, %c0_70, %c0_71] : memref<1x16x1x16x4xf32, #tpu.memory_space<vmem>>, vector<1x1x1x16x4xf32>
    %55 = vector.shape_cast %54 : vector<1x1x1x16x4xf32> to vector<16x4xf32>
    %56 = vector.shape_cast %53 : vector<16x4xf32> to vector<1x1x1x16x4xf32>
    tpu.vector_store %arg3[%c0_68, %c8, %c0_69, %c0_70, %c0_71], %56 {strides = array<i32>} : memref<1x16x1x16x4xf32, #tpu.memory_space<vmem>>, vector<1x1x1x16x4xf32>,
    %c1_72 = arith.constant 1 : index
    %c0_73 = arith.constant 0 : index
    %57 = tpu.strided_load %arg4[%c1_72, %c0_73] {strides = array<i32: 4, 1>} : memref<16x16xf32, #tpu.memory_space<vmem>>, vector<4x16xf32>
    %58 = tpu.transpose %57, [1, 0] : vector<4x16xf32> -> vector<16x4xf32>
    %c0_74 = arith.constant 0 : index
    %c9 = arith.constant 9 : index
    %c0_75 = arith.constant 0 : index
    %c0_76 = arith.constant 0 : index
    %c0_77 = arith.constant 0 : index
    %59 = vector.load %arg3[%c0_74, %c9, %c0_75, %c0_76, %c0_77] : memref<1x16x1x16x4xf32, #tpu.memory_space<vmem>>, vector<1x1x1x16x4xf32>
    %60 = vector.shape_cast %59 : vector<1x1x1x16x4xf32> to vector<16x4xf32>
    %61 = vector.shape_cast %58 : vector<16x4xf32> to vector<1x1x1x16x4xf32>
    tpu.vector_store %arg3[%c0_74, %c9, %c0_75, %c0_76, %c0_77], %61 {strides = array<i32>} : memref<1x16x1x16x4xf32, #tpu.memory_space<vmem>>, vector<1x1x1x16x4xf32>,
    %c2_78 = arith.constant 2 : index
    %c0_79 = arith.constant 0 : index
    %62 = tpu.strided_load %arg4[%c2_78, %c0_79] {strides = array<i32: 4, 1>} : memref<16x16xf32, #tpu.memory_space<vmem>>, vector<4x16xf32>
    %63 = tpu.transpose %62, [1, 0] : vector<4x16xf32> -> vector<16x4xf32>
    %c0_80 = arith.constant 0 : index
    %c10 = arith.constant 10 : index
    %c0_81 = arith.constant 0 : index
    %c0_82 = arith.constant 0 : index
    %c0_83 = arith.constant 0 : index
    %64 = vector.load %arg3[%c0_80, %c10, %c0_81, %c0_82, %c0_83] : memref<1x16x1x16x4xf32, #tpu.memory_space<vmem>>, vector<1x1x1x16x4xf32>
    %65 = vector.shape_cast %64 : vector<1x1x1x16x4xf32> to vector<16x4xf32>
    %66 = vector.shape_cast %63 : vector<16x4xf32> to vector<1x1x1x16x4xf32>
    tpu.vector_store %arg3[%c0_80, %c10, %c0_81, %c0_82, %c0_83], %66 {strides = array<i32>} : memref<1x16x1x16x4xf32, #tpu.memory_space<vmem>>, vector<1x1x1x16x4xf32>,
    %c3_84 = arith.constant 3 : index
    %c0_85 = arith.constant 0 : index
    %67 = tpu.strided_load %arg4[%c3_84, %c0_85] {strides = array<i32: 4, 1>} : memref<16x16xf32, #tpu.memory_space<vmem>>, vector<4x16xf32>
    %68 = tpu.transpose %67, [1, 0] : vector<4x16xf32> -> vector<16x4xf32>
    %c0_86 = arith.constant 0 : index
    %c11 = arith.constant 11 : index
    %c0_87 = arith.constant 0 : index
    %c0_88 = arith.constant 0 : index
    %c0_89 = arith.constant 0 : index
    %69 = vector.load %arg3[%c0_86, %c11, %c0_87, %c0_88, %c0_89] : memref<1x16x1x16x4xf32, #tpu.memory_space<vmem>>, vector<1x1x1x16x4xf32>
    %70 = vector.shape_cast %69 : vector<1x1x1x16x4xf32> to vector<16x4xf32>
    %71 = vector.shape_cast %68 : vector<16x4xf32> to vector<1x1x1x16x4xf32>
    tpu.vector_store %arg3[%c0_86, %c11, %c0_87, %c0_88, %c0_89], %71 {strides = array<i32>} : memref<1x16x1x16x4xf32, #tpu.memory_space<vmem>>, vector<1x1x1x16x4xf32>,
    %c0_90 = arith.constant 0 : index
    %c0_91 = arith.constant 0 : index
    %c3_92 = arith.constant 3 : index
    %c0_93 = arith.constant 0 : index
    %72 = tpu.strided_load %arg2[%c0_90, %c0_91, %c3_92, %c0_93] {strides = array<i32: 1, 1, 4, 1>} : memref<1x1x64x16xf32, #tpu.memory_space<vmem>>, vector<1x1x16x16xf32>
    %73 = vector.shape_cast %72 : vector<1x1x16x16xf32> to vector<16x16xf32>
    %74 = tpu.transpose %73, [1, 0] : vector<16x16xf32> -> vector<16x16xf32>
    %c0_94 = arith.constant 0 : index
    %c0_95 = arith.constant 0 : index
    %75 = vector.load %arg4[%c0_94, %c0_95] : memref<16x16xf32, #tpu.memory_space<vmem>>, vector<16x16xf32>
    tpu.vector_store %arg4[%c0_94, %c0_95], %74 {strides = array<i32>} : memref<16x16xf32, #tpu.memory_space<vmem>>, vector<16x16xf32>,
    %c0_96 = arith.constant 0 : index
    %c0_97 = arith.constant 0 : index
    %76 = tpu.strided_load %arg4[%c0_96, %c0_97] {strides = array<i32: 4, 1>} : memref<16x16xf32, #tpu.memory_space<vmem>>, vector<4x16xf32>
    %77 = tpu.transpose %76, [1, 0] : vector<4x16xf32> -> vector<16x4xf32>
    %c0_98 = arith.constant 0 : index
    %c12 = arith.constant 12 : index
    %c0_99 = arith.constant 0 : index
    %c0_100 = arith.constant 0 : index
    %c0_101 = arith.constant 0 : index
    %78 = vector.load %arg3[%c0_98, %c12, %c0_99, %c0_100, %c0_101] : memref<1x16x1x16x4xf32, #tpu.memory_space<vmem>>, vector<1x1x1x16x4xf32>
    %79 = vector.shape_cast %78 : vector<1x1x1x16x4xf32> to vector<16x4xf32>
    %80 = vector.shape_cast %77 : vector<16x4xf32> to vector<1x1x1x16x4xf32>
    tpu.vector_store %arg3[%c0_98, %c12, %c0_99, %c0_100, %c0_101], %80 {strides = array<i32>} : memref<1x16x1x16x4xf32, #tpu.memory_space<vmem>>, vector<1x1x1x16x4xf32>,
    %c1_102 = arith.constant 1 : index
    %c0_103 = arith.constant 0 : index
    %81 = tpu.strided_load %arg4[%c1_102, %c0_103] {strides = array<i32: 4, 1>} : memref<16x16xf32, #tpu.memory_space<vmem>>, vector<4x16xf32>
    %82 = tpu.transpose %81, [1, 0] : vector<4x16xf32> -> vector<16x4xf32>
    %c0_104 = arith.constant 0 : index
    %c13 = arith.constant 13 : index
    %c0_105 = arith.constant 0 : index
    %c0_106 = arith.constant 0 : index
    %c0_107 = arith.constant 0 : index
    %83 = vector.load %arg3[%c0_104, %c13, %c0_105, %c0_106, %c0_107] : memref<1x16x1x16x4xf32, #tpu.memory_space<vmem>>, vector<1x1x1x16x4xf32>
    %84 = vector.shape_cast %83 : vector<1x1x1x16x4xf32> to vector<16x4xf32>
    %85 = vector.shape_cast %82 : vector<16x4xf32> to vector<1x1x1x16x4xf32>
    tpu.vector_store %arg3[%c0_104, %c13, %c0_105, %c0_106, %c0_107], %85 {strides = array<i32>} : memref<1x16x1x16x4xf32, #tpu.memory_space<vmem>>, vector<1x1x1x16x4xf32>,
    %c2_108 = arith.constant 2 : index
    %c0_109 = arith.constant 0 : index
    %86 = tpu.strided_load %arg4[%c2_108, %c0_109] {strides = array<i32: 4, 1>} : memref<16x16xf32, #tpu.memory_space<vmem>>, vector<4x16xf32>
    %87 = tpu.transpose %86, [1, 0] : vector<4x16xf32> -> vector<16x4xf32>
    %c0_110 = arith.constant 0 : index
    %c14 = arith.constant 14 : index
    %c0_111 = arith.constant 0 : index
    %c0_112 = arith.constant 0 : index
    %c0_113 = arith.constant 0 : index
    %88 = vector.load %arg3[%c0_110, %c14, %c0_111, %c0_112, %c0_113] : memref<1x16x1x16x4xf32, #tpu.memory_space<vmem>>, vector<1x1x1x16x4xf32>
    %89 = vector.shape_cast %88 : vector<1x1x1x16x4xf32> to vector<16x4xf32>
    %90 = vector.shape_cast %87 : vector<16x4xf32> to vector<1x1x1x16x4xf32>
    tpu.vector_store %arg3[%c0_110, %c14, %c0_111, %c0_112, %c0_113], %90 {strides = array<i32>} : memref<1x16x1x16x4xf32, #tpu.memory_space<vmem>>, vector<1x1x1x16x4xf32>,
    %c3_114 = arith.constant 3 : index
    %c0_115 = arith.constant 0 : index
    %91 = tpu.strided_load %arg4[%c3_114, %c0_115] {strides = array<i32: 4, 1>} : memref<16x16xf32, #tpu.memory_space<vmem>>, vector<4x16xf32>
    %92 = tpu.transpose %91, [1, 0] : vector<4x16xf32> -> vector<16x4xf32>
    %c0_116 = arith.constant 0 : index
    %c15 = arith.constant 15 : index
    %c0_117 = arith.constant 0 : index
    %c0_118 = arith.constant 0 : index
    %c0_119 = arith.constant 0 : index
    %93 = vector.load %arg3[%c0_116, %c15, %c0_117, %c0_118, %c0_119] : memref<1x16x1x16x4xf32, #tpu.memory_space<vmem>>, vector<1x1x1x16x4xf32>
    %94 = vector.shape_cast %93 : vector<1x1x1x16x4xf32> to vector<16x4xf32>
    %95 = vector.shape_cast %92 : vector<16x4xf32> to vector<1x1x1x16x4xf32>
    tpu.vector_store %arg3[%c0_116, %c15, %c0_117, %c0_118, %c0_119], %95 {strides = array<i32>} : memref<1x16x1x16x4xf32, #tpu.memory_space<vmem>>, vector<1x1x1x16x4xf32>,
    return
  }
  func.func @transform_0(%arg0: i32, %arg1: i32) -> (i32, i32, i32, i32) {
    %c0_i32 = arith.constant 0 : i32
    %c0_i32_0 = arith.constant 0 : i32
    %c0_i32_1 = arith.constant 0 : i32
    return %arg0, %arg1, %c0_i32, %c0_i32_0 : i32, i32, i32, i32
  }
  func.func @transform_1(%arg0: i32, %arg1: i32) -> (i32, i32, i32, i32, i32) {
    %c0_i32 = arith.constant 0 : i32
    %c0_i32_0 = arith.constant 0 : i32
    %c0_i32_1 = arith.constant 0 : i32
    %c0_i32_2 = arith.constant 0 : i32
    return %arg0, %c0_i32, %arg1, %c0_i32_0, %c0_i32_1 : i32, i32, i32, i32, i32
  }
}

</mosaic_0001>

<llo_original>
// kernel: tpu_custom_call.1
$region0: #{tpu_custom_call.1}
  #allocation0 [shape = 'u32[]', space=smem, size = 0x4, offset = 0x4, fixed_abs, tag = 'smem constant byte address 0x4 - core index']
  #allocation1 [shape = 'u32[144,128]{1,0:T(1,128)}', space=vmem, size = 0x12000, scoped, tag = 'internal scratch']
  #allocation2 [shape = 'f32[16,16]{1,0:T(8,128)}', space=vmem, size = 0x2000, scoped, tag = 'scratch operand']
  %s0 = inlined_call_operand.vmem [shape: f32[2,1,64,16], index: 0, kind: input, shape index: {}]
  %s1 = inlined_call_operand.vmem [shape: f32[2,16,1,16,4], index: 1, kind: output, shape index: {}]
  %s2 = sld [smem:[#allocation0]]
  $region37: #{tpu_custom_call.1} parent=0
    _
  %s4 = ssub.s32 1, %s2
  %s5 = scalar_select 0, %s4, %s2
  loop: start=0, step=1, limit=4
  $region2: #{tpu_custom_call.1} parent=0 // loop_pre_header
    _
  $region3: #{tpu_custom_call.1} parent=0 // loop_header
    %s7 = sphi 0, %s11
    %p8 = scmp.ge.s32.totalorder %s7, 4
    %s14 = sphi 0, %s26
    %s15 = sphi 0, %s22
    %s16 = sphi 0, %s14
    %s17 = sphi 0, %s15
    %s18 = sphi 0, %s16
    %s19 = sphi 0, %s17
    %s31 = sphi 0, %s33
    %s34 = sphi 0, %s31
    %s35 = sphi 0, %s34
    %s51 = sphi 0, %s35
    %s59 = sphi 0, %s61
    %s62 = sphi 0, %s59
    %s63 = sphi 0, %s62
    %s79 = sphi 0, %s63
  $region4: #{tpu_custom_call.1} parent=0 // loop_header_branch
    %10 = sbr.rel (%p8) target = $region8
  $region5: #{tpu_custom_call.1} parent=0 // loop_body
    %s12 = ssub.s32 %s7, 1
    %s13 = ssub.s32 %s7, 2
    %s20 = sadd.s32 1, %s15
    %p21 = scmp.ge.s32.totalorder %s20, 1
    %s22 = scalar_select %p21, 0, %s20
    %s23 = sadd.s32 1, %s14
    %s24 = scalar_select %p21, %s23, %s14
    %p25 = scmp.ge.s32.totalorder %s24, 2
    %s26 = scalar_select %p25, 0, %s24
    %s27 = ssub.s32 %s14, %s26
    %s28 = ssub.s32 %s15, %s22
    %s29 = sor.u32 %s27, %s28
    %p30 = scmp.eq.s32.totalorder %s29, 0
    %s32 = sadd.s32 %s31, 1
    %s33 = scalar_select %p30, %s31, %s32
    %p36 = pneg %p30
    %p37 = scmp.eq.s32.totalorder %s7, 1
    %p38 = por %p36, %p37
    %p39 = scmp.ne.s32.totalorder %s31, %s34
    %p40 = scmp.eq.s32.totalorder %s7, 0
    %p41 = por %p39, %p40
    %p42 = scmp.ne.s32.totalorder %s31, %s34
    %p43 = scmp.eq.s32.totalorder %s12, 1
    %p44 = por %p42, %p43
    %p45 = scmp.ne.s32.totalorder %s34, %s35
    %p46 = scmp.eq.s32.totalorder %s12, 0
    %p47 = por %p45, %p46
    %p48 = scmp.ne.s32.totalorder %s34, %s35
    %p49 = scmp.eq.s32.totalorder %s13, 1
    %p50 = por %p48, %p49
    %p52 = scmp.ne.s32.totalorder %s35, %s51
    %p53 = scmp.eq.s32.totalorder %s13, 0
    %p54 = por %p52, %p53
    %s55 = ssub.s32 %s14, %s26
    %s56 = ssub.s32 %s15, %s22
    %s57 = sor.u32 %s55, %s56
    %p58 = scmp.eq.s32.totalorder %s57, 0
    %s60 = sadd.s32 %s59, 1
    %s61 = scalar_select %p58, %s59, %s60
    %p64 = pneg %p58
    %p65 = scmp.eq.s32.totalorder %s7, 1
    %p66 = por %p64, %p65
    %p67 = scmp.ne.s32.totalorder %s59, %s62
    %p68 = scmp.eq.s32.totalorder %s7, 0
    %p69 = por %p67, %p68
    %p70 = scmp.ne.s32.totalorder %s59, %s62
    %p71 = scmp.eq.s32.totalorder %s12, 1
    %p72 = por %p70, %p71
    %p73 = scmp.ne.s32.totalorder %s62, %s63
    %p74 = scmp.eq.s32.totalorder %s12, 0
    %p75 = por %p73, %p74
    %p76 = scmp.ne.s32.totalorder %s62, %s63
    %p77 = scmp.eq.s32.totalorder %s13, 1
    %p78 = por %p76, %p77
    %p80 = scmp.ne.s32.totalorder %s63, %s79
    %p81 = scmp.eq.s32.totalorder %s13, 0
    %p82 = por %p80, %p81
    %p83 = scmp.le.s32.totalorder 1, %s7
    %p84 = scmp.lt.s32.totalorder %s7, 3
    %p85 = pnand %p83, %p84
    %p86 = pneg %p85
    // Predicated region
    $region9: #{tpu_custom_call.1} parent=5 // pred_check
      _
    $region10: #{tpu_custom_call.1} parent=5 // pred_check_branch
      %88 = sbr.rel (%p85) target = $region12
    $region11: #{tpu_custom_call.1} parent=5 // pred_region
      %s89 = ssub.s32 %s7, 1
    $region12: #{tpu_custom_call.1} parent=5 // pred_fallthru
      _
    %p90 = scmp.lt.s32.totalorder %s7, 2
    // Predicated region
    $region13: #{tpu_custom_call.1} parent=5 // pred_check
      %p91 = pneg %p90
    $region14: #{tpu_custom_call.1} parent=5 // pred_check_branch
      %93 = sbr.rel (%p91) target = $region16
    $region15: #{tpu_custom_call.1} parent=5 // pred_region
      // Predicated region
      $region17: #{tpu_custom_call.1} parent=15 // pred_check
        %p94 = pneg %p41
      $region18: #{tpu_custom_call.1} parent=15 // pred_check_branch
        %96 = sbr.rel (%p94) target = $region20
      $region19: #{tpu_custom_call.1} parent=15 // pred_region
        %p97 = scmp.lt.s32.totalorder %s14, 1
        %s98 = scalar_select %p97, %s14, 1
        %p99 = scmp.lt.s32.totalorder %s15, 0
        %s100 = scalar_select %p99, %s15, 0
        %s101 = smul.addr %s100, 8
        %s102 = smul.addr %s98, 8
        %s103 = sadd.s32 %s101, %s102
        %s104 = smul.addr %s103, 8
        %s105 = scalar_lea.vmem %s0, %s104
      $region20: #{tpu_custom_call.1} parent=15 // pred_fallthru
        _
    $region16: #{tpu_custom_call.1} parent=5 // pred_fallthru
      _
    %p106 = scmp.le.s32.totalorder 1, %s7
    %p107 = scmp.lt.s32.totalorder %s7, 3
    %p108 = pnand %p106, %p107
    %p109 = pneg %p108
    // Predicated region
    $region21: #{tpu_custom_call.1} parent=5 // pred_check
      _
    $region22: #{tpu_custom_call.1} parent=5 // pred_check_branch
      %111 = sbr.rel (%p108) target = $region24
    $region23: #{tpu_custom_call.1} parent=5 // pred_region
      %s112 = ssub.s32 %s7, 1
      %p113 = scmp.lt.s32.totalorder %s16, 1
      %s114 = scalar_select %p113, %s16, 1
      %p115 = scmp.lt.s32.totalorder %s17, 0
      %s116 = scalar_select %p115, %s17, 0
      %s117 = smul.addr %s116, 8
      %s118 = smul.addr %s114, 8
      %s119 = sadd.s32 %s117, %s118
      %s120 = smul.addr %s119, 8
      %s121 = scalar_lea.vmem %s0, %s120
      %p122 = pneg %p47
      %p123 = pneg %p44
      %p124 = pneg %p75
      %p125 = pneg %p72
      %p126 = scmp.lt.s32.totalorder %s16, 1
      %s127 = scalar_select %p126, %s16, 1
      %p128 = scmp.lt.s32.totalorder %s17, 0
      %s129 = scalar_select %p128, %s17, 0
      %s130 = smul.addr %s129, 2
      %s131 = smul.addr %s127, 32
      %s132 = sadd.s32 %s130, %s131
      %s133 = smul.addr %s132, 8
      %s134 = scalar_lea.vmem %s1, %s133
      %p135 = scmp.lt.s32.totalorder %s16, 1
      %s136 = scalar_select %p135, %s16, 1
      %p137 = scmp.lt.s32.totalorder %s17, 0
      %s138 = scalar_select %p137, %s17, 0
      %s139 = smul.addr %s138, 8
      %s140 = smul.addr %s136, 8
      %s141 = sadd.s32 %s139, %s140
      %s142 = smul.addr %s141, 8
      %s143 = scalar_lea.vmem %s0, %s142
      %p144 = scmp.lt.s32.totalorder %s16, 1
      %s145 = scalar_select %p144, %s16, 1
      %p146 = scmp.lt.s32.totalorder %s17, 0
      %s147 = scalar_select %p146, %s17, 0
      %s148 = smul.addr %s147, 2
      %s149 = smul.addr %s145, 32
      %s150 = sadd.s32 %s148, %s149
      %s151 = smul.addr %s150, 8
      %s152 = scalar_lea.vmem %s1, %s151
      %v153 = vld [vmem:[%s143] ss:$4 sm:$0xff]
      %s154 = scalar_lea.vmem %s143, 32
      %v155 = vld [vmem:[%s154] ss:$4 sm:$0xff]
      %156 = vxpose.xlu0.b32.start [1/16] %v153, 128
      %157 = vxpose.xlu0.b32.cont [2/16] %v155, 128
      %158 = vxpose.xlu0.b32.cont [3/16] 0.0, 128
      %159 = vxpose.xlu0.b32.cont [4/16] 0.0, 128
      %160 = vxpose.xlu0.b32.cont [5/16] 0.0, 128
      %161 = vxpose.xlu0.b32.cont [6/16] 0.0, 128
      %162 = vxpose.xlu0.b32.cont [7/16] 0.0, 128
      %163 = vxpose.xlu0.b32.cont [8/16] 0.0, 128
      %164 = vxpose.xlu0.b32.cont [9/16] 0.0, 128
      %165 = vxpose.xlu0.b32.cont [10/16] 0.0, 128
      %166 = vxpose.xlu0.b32.cont [11/16] 0.0, 128
      %167 = vxpose.xlu0.b32.cont [12/16] 0.0, 128
      %168 = vxpose.xlu0.b32.cont [13/16] 0.0, 128
      %169 = vxpose.xlu0.b32.cont [14/16] 0.0, 128
      %170 = vxpose.xlu0.b32.cont [15/16] 0.0, 128
      %171 = vxpose.xlu0.b32.end [16/16] 0.0, 128
      %v172 = vpop.trf.xlu0
      %v173 = vpop.trf.xlu0
      %v174 = vpop.trf.xlu0
      %v175 = vpop.trf.xlu0
      %v176 = vpop.trf.xlu0
      %v177 = vpop.trf.xlu0
      %v178 = vpop.trf.xlu0
      %v179 = vpop.trf.xlu0
      %v180 = vpop.trf.xlu0
      %v181 = vpop.trf.xlu0
      %v182 = vpop.trf.xlu0
      %v183 = vpop.trf.xlu0
      %v184 = vpop.trf.xlu0
      %v185 = vpop.trf.xlu0
      %v186 = vpop.trf.xlu0
      %v187 = vpop.trf.xlu0
      %vm188 = vcmask 130048
      %189 = vst.msk [vmem:[#allocation2] sm:$0xff] %vm188, %v172
      %190 = vst.msk [vmem:[#allocation2 + $0x8] sm:$0xff] %vm188, %v173
      %v191 = vld [vmem:[#allocation2] ss:$4 sm:$0xf]
      %192 = vxpose.xlu0.b32.start [1/16] %v191, 128
      %193 = vxpose.xlu0.b32.cont [2/16] 0.0, 128
      %194 = vxpose.xlu0.b32.cont [3/16] 0.0, 128
      %195 = vxpose.xlu0.b32.cont [4/16] 0.0, 128
      %196 = vxpose.xlu0.b32.cont [5/16] 0.0, 128
      %197 = vxpose.xlu0.b32.cont [6/16] 0.0, 128
      %198 = vxpose.xlu0.b32.cont [7/16] 0.0, 128
      %199 = vxpose.xlu0.b32.cont [8/16] 0.0, 128
      %200 = vxpose.xlu0.b32.cont [9/16] 0.0, 128
      %201 = vxpose.xlu0.b32.cont [10/16] 0.0, 128
      %202 = vxpose.xlu0.b32.cont [11/16] 0.0, 128
      %203 = vxpose.xlu0.b32.cont [12/16] 0.0, 128
      %204 = vxpose.xlu0.b32.cont [13/16] 0.0, 128
      %205 = vxpose.xlu0.b32.cont [14/16] 0.0, 128
      %206 = vxpose.xlu0.b32.cont [15/16] 0.0, 128
      %207 = vxpose.xlu0.b32.end [16/16] 0.0, 128
      %v208 = vpop.trf.xlu0
      %v209 = vpop.trf.xlu0
      %v210 = vpop.trf.xlu0
      %v211 = vpop.trf.xlu0
      %v212 = vpop.trf.xlu0
      %v213 = vpop.trf.xlu0
      %v214 = vpop.trf.xlu0
      %v215 = vpop.trf.xlu0
      %v216 = vpop.trf.xlu0
      %v217 = vpop.trf.xlu0
      %v218 = vpop.trf.xlu0
      %v219 = vpop.trf.xlu0
      %v220 = vpop.trf.xlu0
      %v221 = vpop.trf.xlu0
      %v222 = vpop.trf.xlu0
      %v223 = vpop.trf.xlu0
      %vm224 = vcmask 31744
      %225 = vst.msk [vmem:[%s152] sm:$0xff] %vm224, %v208
      %226 = vst.msk [vmem:[%s152 + $0x8] sm:$0xff] %vm224, %v209
      %s227 = scalar_lea.vmem [#allocation2], 1
      %v228 = vld [vmem:[%s227] ss:$4 sm:$0xf]
      %229 = vxpose.xlu0.b32.start [1/16] %v228, 128
      %230 = vxpose.xlu0.b32.cont [2/16] 0.0, 128
      %231 = vxpose.xlu0.b32.cont [3/16] 0.0, 128
      %232 = vxpose.xlu0.b32.cont [4/16] 0.0, 128
      %233 = vxpose.xlu0.b32.cont [5/16] 0.0, 128
      %234 = vxpose.xlu0.b32.cont [6/16] 0.0, 128
      %235 = vxpose.xlu0.b32.cont [7/16] 0.0, 128
      %236 = vxpose.xlu0.b32.cont [8/16] 0.0, 128
      %237 = vxpose.xlu0.b32.cont [9/16] 0.0, 128
      %238 = vxpose.xlu0.b32.cont [10/16] 0.0, 128
      %239 = vxpose.xlu0.b32.cont [11/16] 0.0, 128
      %240 = vxpose.xlu0.b32.cont [12/16] 0.0, 128
      %241 = vxpose.xlu0.b32.cont [13/16] 0.0, 128
      %242 = vxpose.xlu0.b32.cont [14/16] 0.0, 128
      %243 = vxpose.xlu0.b32.cont [15/16] 0.0, 128
      %244 = vxpose.xlu0.b32.end [16/16] 0.0, 128
      %v245 = vpop.trf.xlu0
      %v246 = vpop.trf.xlu0
      %v247 = vpop.trf.xlu0
      %v248 = vpop.trf.xlu0
      %v249 = vpop.trf.xlu0
      %v250 = vpop.trf.xlu0
      %v251 = vpop.trf.xlu0
      %v252 = vpop.trf.xlu0
      %v253 = vpop.trf.xlu0
      %v254 = vpop.trf.xlu0
      %v255 = vpop.trf.xlu0
      %v256 = vpop.trf.xlu0
      %v257 = vpop.trf.xlu0
      %v258 = vpop.trf.xlu0
      %v259 = vpop.trf.xlu0
      %v260 = vpop.trf.xlu0
      %s261 = scalar_lea.vmem %s152, 16
      %262 = vst.msk [vmem:[%s261] sm:$0xff] %vm224, %v245
      %263 = vst.msk [vmem:[%s261 + $0x8] sm:$0xff] %vm224, %v246
      %s264 = scalar_lea.vmem [#allocation2], 2
      %v265 = vld [vmem:[%s264] ss:$4 sm:$0xf]
      %266 = vxpose.xlu0.b32.start [1/16] %v265, 128
      %267 = vxpose.xlu0.b32.cont [2/16] 0.0, 128
      %268 = vxpose.xlu0.b32.cont [3/16] 0.0, 128
      %269 = vxpose.xlu0.b32.cont [4/16] 0.0, 128
      %270 = vxpose.xlu0.b32.cont [5/16] 0.0, 128
      %271 = vxpose.xlu0.b32.cont [6/16] 0.0, 128
      %272 = vxpose.xlu0.b32.cont [7/16] 0.0, 128
      %273 = vxpose.xlu0.b32.cont [8/16] 0.0, 128
      %274 = vxpose.xlu0.b32.cont [9/16] 0.0, 128
      %275 = vxpose.xlu0.b32.cont [10/16] 0.0, 128
      %276 = vxpose.xlu0.b32.cont [11/16] 0.0, 128
      %277 = vxpose.xlu0.b32.cont [12/16] 0.0, 128
      %278 = vxpose.xlu0.b32.cont [13/16] 0.0, 128
      %279 = vxpose.xlu0.b32.cont [14/16] 0.0, 128
      %280 = vxpose.xlu0.b32.cont [15/16] 0.0, 128
      %281 = vxpose.xlu0.b32.end [16/16] 0.0, 128
      %v282 = vpop.trf.xlu0
      %v283 = vpop.trf.xlu0
      %v284 = vpop.trf.xlu0
      %v285 = vpop.trf.xlu0
      %v286 = vpop.trf.xlu0
      %v287 = vpop.trf.xlu0
      %v288 = vpop.trf.xlu0
      %v289 = vpop.trf.xlu0
      %v290 = vpop.trf.xlu0
      %v291 = vpop.trf.xlu0
      %v292 = vpop.trf.xlu0
      %v293 = vpop.trf.xlu0
      %v294 = vpop.trf.xlu0
      %v295 = vpop.trf.xlu0
      %v296 = vpop.trf.xlu0
      %v297 = vpop.trf.xlu0
      %s298 = scalar_lea.vmem %s152, 32
      %299 = vst.msk [vmem:[%s298] sm:$0xff] %vm224, %v282
      %300 = vst.msk [vmem:[%s298 + $0x8] sm:$0xff] %vm224, %v283
      %s301 = scalar_lea.vmem [#allocation2], 3
      %v302 = vld [vmem:[%s301] ss:$4 sm:$0xf]
      %303 = vxpose.xlu0.b32.start [1/16] %v302, 128
      %304 = vxpose.xlu0.b32.cont [2/16] 0.0, 128
      %305 = vxpose.xlu0.b32.cont [3/16] 0.0, 128
      %306 = vxpose.xlu0.b32.cont [4/16] 0.0, 128
      %307 = vxpose.xlu0.b32.cont [5/16] 0.0, 128
      %308 = vxpose.xlu0.b32.cont [6/16] 0.0, 128
      %309 = vxpose.xlu0.b32.cont [7/16] 0.0, 128
      %310 = vxpose.xlu0.b32.cont [8/16] 0.0, 128
      %311 = vxpose.xlu0.b32.cont [9/16] 0.0, 128
      %312 = vxpose.xlu0.b32.cont [10/16] 0.0, 128
      %313 = vxpose.xlu0.b32.cont [11/16] 0.0, 128
      %314 = vxpose.xlu0.b32.cont [12/16] 0.0, 128
      %315 = vxpose.xlu0.b32.cont [13/16] 0.0, 128
      %316 = vxpose.xlu0.b32.cont [14/16] 0.0, 128
      %317 = vxpose.xlu0.b32.cont [15/16] 0.0, 128
      %318 = vxpose.xlu0.b32.end [16/16] 0.0, 128
      %v319 = vpop.trf.xlu0
      %v320 = vpop.trf.xlu0
      %v321 = vpop.trf.xlu0
      %v322 = vpop.trf.xlu0
      %v323 = vpop.trf.xlu0
      %v324 = vpop.trf.xlu0
      %v325 = vpop.trf.xlu0
      %v326 = vpop.trf.xlu0
      %v327 = vpop.trf.xlu0
      %v328 = vpop.trf.xlu0
      %v329 = vpop.trf.xlu0
      %v330 = vpop.trf.xlu0
      %v331 = vpop.trf.xlu0
      %v332 = vpop.trf.xlu0
      %v333 = vpop.trf.xlu0
      %v334 = vpop.trf.xlu0
      %s335 = scalar_lea.vmem %s152, 48
      %336 = vst.msk [vmem:[%s335] sm:$0xff] %vm224, %v319
      %337 = vst.msk [vmem:[%s335 + $0x8] sm:$0xff] %vm224, %v320
      %s338 = scalar_lea.vmem %s143, 1
      %v339 = vld [vmem:[%s338] ss:$4 sm:$0xff]
      %s340 = scalar_lea.vmem %s143, 33
      %v341 = vld [vmem:[%s340] ss:$4 sm:$0xff]
      %342 = vxpose.xlu0.b32.start [1/16] %v339, 128
      %343 = vxpose.xlu0.b32.cont [2/16] %v341, 128
      %344 = vxpose.xlu0.b32.cont [3/16] 0.0, 128
      %345 = vxpose.xlu0.b32.cont [4/16] 0.0, 128
      %346 = vxpose.xlu0.b32.cont [5/16] 0.0, 128
      %347 = vxpose.xlu0.b32.cont [6/16] 0.0, 128
      %348 = vxpose.xlu0.b32.cont [7/16] 0.0, 128
      %349 = vxpose.xlu0.b32.cont [8/16] 0.0, 128
      %350 = vxpose.xlu0.b32.cont [9/16] 0.0, 128
      %351 = vxpose.xlu0.b32.cont [10/16] 0.0, 128
      %352 = vxpose.xlu0.b32.cont [11/16] 0.0, 128
      %353 = vxpose.xlu0.b32.cont [12/16] 0.0, 128
      %354 = vxpose.xlu0.b32.cont [13/16] 0.0, 128
      %355 = vxpose.xlu0.b32.cont [14/16] 0.0, 128
      %356 = vxpose.xlu0.b32.cont [15/16] 0.0, 128
      %357 = vxpose.xlu0.b32.end [16/16] 0.0, 128
      %v358 = vpop.trf.xlu0
      %v359 = vpop.trf.xlu0
      %v360 = vpop.trf.xlu0
      %v361 = vpop.trf.xlu0
      %v362 = vpop.trf.xlu0
      %v363 = vpop.trf.xlu0
      %v364 = vpop.trf.xlu0
      %v365 = vpop.trf.xlu0
      %v366 = vpop.trf.xlu0
      %v367 = vpop.trf.xlu0
      %v368 = vpop.trf.xlu0
      %v369 = vpop.trf.xlu0
      %v370 = vpop.trf.xlu0
      %v371 = vpop.trf.xlu0
      %v372 = vpop.trf.xlu0
      %v373 = vpop.trf.xlu0
      %374 = vst.msk [vmem:[#allocation2] sm:$0xff] %vm188, %v358
      %375 = vst.msk [vmem:[#allocation2 + $0x8] sm:$0xff] %vm188, %v359
      %v376 = vld [vmem:[#allocation2] ss:$4 sm:$0xf]
      %377 = vxpose.xlu0.b32.start [1/16] %v376, 128
      %378 = vxpose.xlu0.b32.cont [2/16] 0.0, 128
      %379 = vxpose.xlu0.b32.cont [3/16] 0.0, 128
      %380 = vxpose.xlu0.b32.cont [4/16] 0.0, 128
      %381 = vxpose.xlu0.b32.cont [5/16] 0.0, 128
      %382 = vxpose.xlu0.b32.cont [6/16] 0.0, 128
      %383 = vxpose.xlu0.b32.cont [7/16] 0.0, 128
      %384 = vxpose.xlu0.b32.cont [8/16] 0.0, 128
      %385 = vxpose.xlu0.b32.cont [9/16] 0.0, 128
      %386 = vxpose.xlu0.b32.cont [10/16] 0.0, 128
      %387 = vxpose.xlu0.b32.cont [11/16] 0.0, 128
      %388 = vxpose.xlu0.b32.cont [12/16] 0.0, 128
      %389 = vxpose.xlu0.b32.cont [13/16] 0.0, 128
      %390 = vxpose.xlu0.b32.cont [14/16] 0.0, 128
      %391 = vxpose.xlu0.b32.cont [15/16] 0.0, 128
      %392 = vxpose.xlu0.b32.end [16/16] 0.0, 128
      %v393 = vpop.trf.xlu0
      %v394 = vpop.trf.xlu0
      %v395 = vpop.trf.xlu0
      %v396 = vpop.trf.xlu0
      %v397 = vpop.trf.xlu0
      %v398 = vpop.trf.xlu0
      %v399 = vpop.trf.xlu0
      %v400 = vpop.trf.xlu0
      %v401 = vpop.trf.xlu0
      %v402 = vpop.trf.xlu0
      %v403 = vpop.trf.xlu0
      %v404 = vpop.trf.xlu0
      %v405 = vpop.trf.xlu0
      %v406 = vpop.trf.xlu0
      %v407 = vpop.trf.xlu0
      %v408 = vpop.trf.xlu0
      %s409 = scalar_lea.vmem %s152, 64
      %410 = vst.msk [vmem:[%s409] sm:$0xff] %vm224, %v393
      %411 = vst.msk [vmem:[%s409 + $0x8] sm:$0xff] %vm224, %v394
      %v412 = vld [vmem:[%s227] ss:$4 sm:$0xf]
      %413 = vxpose.xlu0.b32.start [1/16] %v412, 128
      %414 = vxpose.xlu0.b32.cont [2/16] 0.0, 128
      %415 = vxpose.xlu0.b32.cont [3/16] 0.0, 128
      %416 = vxpose.xlu0.b32.cont [4/16] 0.0, 128
      %417 = vxpose.xlu0.b32.cont [5/16] 0.0, 128
      %418 = vxpose.xlu0.b32.cont [6/16] 0.0, 128
      %419 = vxpose.xlu0.b32.cont [7/16] 0.0, 128
      %420 = vxpose.xlu0.b32.cont [8/16] 0.0, 128
      %421 = vxpose.xlu0.b32.cont [9/16] 0.0, 128
      %422 = vxpose.xlu0.b32.cont [10/16] 0.0, 128
      %423 = vxpose.xlu0.b32.cont [11/16] 0.0, 128
      %424 = vxpose.xlu0.b32.cont [12/16] 0.0, 128
      %425 = vxpose.xlu0.b32.cont [13/16] 0.0, 128
      %426 = vxpose.xlu0.b32.cont [14/16] 0.0, 128
      %427 = vxpose.xlu0.b32.cont [15/16] 0.0, 128
      %428 = vxpose.xlu0.b32.end [16/16] 0.0, 128
      %v429 = vpop.trf.xlu0
      %v430 = vpop.trf.xlu0
      %v431 = vpop.trf.xlu0
      %v432 = vpop.trf.xlu0
      %v433 = vpop.trf.xlu0
      %v434 = vpop.trf.xlu0
      %v435 = vpop.trf.xlu0
      %v436 = vpop.trf.xlu0
      %v437 = vpop.trf.xlu0
      %v438 = vpop.trf.xlu0
      %v439 = vpop.trf.xlu0
      %v440 = vpop.trf.xlu0
      %v441 = vpop.trf.xlu0
      %v442 = vpop.trf.xlu0
      %v443 = vpop.trf.xlu0
      %v444 = vpop.trf.xlu0
      %s445 = scalar_lea.vmem %s152, 80
      %446 = vst.msk [vmem:[%s445] sm:$0xff] %vm224, %v429
      %447 = vst.msk [vmem:[%s445 + $0x8] sm:$0xff] %vm224, %v430
      %v448 = vld [vmem:[%s264] ss:$4 sm:$0xf]
      %449 = vxpose.xlu0.b32.start [1/16] %v448, 128
      %450 = vxpose.xlu0.b32.cont [2/16] 0.0, 128
      %451 = vxpose.xlu0.b32.cont [3/16] 0.0, 128
      %452 = vxpose.xlu0.b32.cont [4/16] 0.0, 128
      %453 = vxpose.xlu0.b32.cont [5/16] 0.0, 128
      %454 = vxpose.xlu0.b32.cont [6/16] 0.0, 128
      %455 = vxpose.xlu0.b32.cont [7/16] 0.0, 128
      %456 = vxpose.xlu0.b32.cont [8/16] 0.0, 128
      %457 = vxpose.xlu0.b32.cont [9/16] 0.0, 128
      %458 = vxpose.xlu0.b32.cont [10/16] 0.0, 128
      %459 = vxpose.xlu0.b32.cont [11/16] 0.0, 128
      %460 = vxpose.xlu0.b32.cont [12/16] 0.0, 128
      %461 = vxpose.xlu0.b32.cont [13/16] 0.0, 128
      %462 = vxpose.xlu0.b32.cont [14/16] 0.0, 128
      %463 = vxpose.xlu0.b32.cont [15/16] 0.0, 128
      %464 = vxpose.xlu0.b32.end [16/16] 0.0, 128
      %v465 = vpop.trf.xlu0
      %v466 = vpop.trf.xlu0
      %v467 = vpop.trf.xlu0
      %v468 = vpop.trf.xlu0
      %v469 = vpop.trf.xlu0
      %v470 = vpop.trf.xlu0
      %v471 = vpop.trf.xlu0
      %v472 = vpop.trf.xlu0
      %v473 = vpop.trf.xlu0
      %v474 = vpop.trf.xlu0
      %v475 = vpop.trf.xlu0
      %v476 = vpop.trf.xlu0
      %v477 = vpop.trf.xlu0
      %v478 = vpop.trf.xlu0
      %v479 = vpop.trf.xlu0
      %v480 = vpop.trf.xlu0
      %s481 = scalar_lea.vmem %s152, 96
      %482 = vst.msk [vmem:[%s481] sm:$0xff] %vm224, %v465
      %483 = vst.msk [vmem:[%s481 + $0x8] sm:$0xff] %vm224, %v466
      %v484 = vld [vmem:[%s301] ss:$4 sm:$0xf]
      %485 = vxpose.xlu0.b32.start [1/16] %v484, 128
      %486 = vxpose.xlu0.b32.cont [2/16] 0.0, 128
      %487 = vxpose.xlu0.b32.cont [3/16] 0.0, 128
      %488 = vxpose.xlu0.b32.cont [4/16] 0.0, 128
      %489 = vxpose.xlu0.b32.cont [5/16] 0.0, 128
      %490 = vxpose.xlu0.b32.cont [6/16] 0.0, 128
      %491 = vxpose.xlu0.b32.cont [7/16] 0.0, 128
      %492 = vxpose.xlu0.b32.cont [8/16] 0.0, 128
      %493 = vxpose.xlu0.b32.cont [9/16] 0.0, 128
      %494 = vxpose.xlu0.b32.cont [10/16] 0.0, 128
      %495 = vxpose.xlu0.b32.cont [11/16] 0.0, 128
      %496 = vxpose.xlu0.b32.cont [12/16] 0.0, 128
      %497 = vxpose.xlu0.b32.cont [13/16] 0.0, 128
      %498 = vxpose.xlu0.b32.cont [14/16] 0.0, 128
      %499 = vxpose.xlu0.b32.cont [15/16] 0.0, 128
      %500 = vxpose.xlu0.b32.end [16/16] 0.0, 128
      %v501 = vpop.trf.xlu0
      %v502 = vpop.trf.xlu0
      %v503 = vpop.trf.xlu0
      %v504 = vpop.trf.xlu0
      %v505 = vpop.trf.xlu0
      %v506 = vpop.trf.xlu0
      %v507 = vpop.trf.xlu0
      %v508 = vpop.trf.xlu0
      %v509 = vpop.trf.xlu0
      %v510 = vpop.trf.xlu0
      %v511 = vpop.trf.xlu0
      %v512 = vpop.trf.xlu0
      %v513 = vpop.trf.xlu0
      %v514 = vpop.trf.xlu0
      %v515 = vpop.trf.xlu0
      %v516 = vpop.trf.xlu0
      %s517 = scalar_lea.vmem %s152, 112
      %518 = vst.msk [vmem:[%s517] sm:$0xff] %vm224, %v501
      %519 = vst.msk [vmem:[%s517 + $0x8] sm:$0xff] %vm224, %v502
      %s520 = scalar_lea.vmem %s143, 2
      %v521 = vld [vmem:[%s520] ss:$4 sm:$0xff]
      %s522 = scalar_lea.vmem %s143, 34
      %v523 = vld [vmem:[%s522] ss:$4 sm:$0xff]
      %524 = vxpose.xlu0.b32.start [1/16] %v521, 128
      %525 = vxpose.xlu0.b32.cont [2/16] %v523, 128
      %526 = vxpose.xlu0.b32.cont [3/16] 0.0, 128
      %527 = vxpose.xlu0.b32.cont [4/16] 0.0, 128
      %528 = vxpose.xlu0.b32.cont [5/16] 0.0, 128
      %529 = vxpose.xlu0.b32.cont [6/16] 0.0, 128
      %530 = vxpose.xlu0.b32.cont [7/16] 0.0, 128
      %531 = vxpose.xlu0.b32.cont [8/16] 0.0, 128
      %532 = vxpose.xlu0.b32.cont [9/16] 0.0, 128
      %533 = vxpose.xlu0.b32.cont [10/16] 0.0, 128
      %534 = vxpose.xlu0.b32.cont [11/16] 0.0, 128
      %535 = vxpose.xlu0.b32.cont [12/16] 0.0, 128
      %536 = vxpose.xlu0.b32.cont [13/16] 0.0, 128
      %537 = vxpose.xlu0.b32.cont [14/16] 0.0, 128
      %538 = vxpose.xlu0.b32.cont [15/16] 0.0, 128
      %539 = vxpose.xlu0.b32.end [16/16] 0.0, 128
      %v540 = vpop.trf.xlu0
      %v541 = vpop.trf.xlu0
      %v542 = vpop.trf.xlu0
      %v543 = vpop.trf.xlu0
      %v544 = vpop.trf.xlu0
      %v545 = vpop.trf.xlu0
      %v546 = vpop.trf.xlu0
      %v547 = vpop.trf.xlu0
      %v548 = vpop.trf.xlu0
      %v549 = vpop.trf.xlu0
      %v550 = vpop.trf.xlu0
      %v551 = vpop.trf.xlu0
      %v552 = vpop.trf.xlu0
      %v553 = vpop.trf.xlu0
      %v554 = vpop.trf.xlu0
      %v555 = vpop.trf.xlu0
      %556 = vst.msk [vmem:[#allocation2] sm:$0xff] %vm188, %v540
      %557 = vst.msk [vmem:[#allocation2 + $0x8] sm:$0xff] %vm188, %v541
      %v558 = vld [vmem:[#allocation2] ss:$4 sm:$0xf]
      %559 = vxpose.xlu0.b32.start [1/16] %v558, 128
      %560 = vxpose.xlu0.b32.cont [2/16] 0.0, 128
      %561 = vxpose.xlu0.b32.cont [3/16] 0.0, 128
      %562 = vxpose.xlu0.b32.cont [4/16] 0.0, 128
      %563 = vxpose.xlu0.b32.cont [5/16] 0.0, 128
      %564 = vxpose.xlu0.b32.cont [6/16] 0.0, 128
      %565 = vxpose.xlu0.b32.cont [7/16] 0.0, 128
      %566 = vxpose.xlu0.b32.cont [8/16] 0.0, 128
      %567 = vxpose.xlu0.b32.cont [9/16] 0.0, 128
      %568 = vxpose.xlu0.b32.cont [10/16] 0.0, 128
      %569 = vxpose.xlu0.b32.cont [11/16] 0.0, 128
      %570 = vxpose.xlu0.b32.cont [12/16] 0.0, 128
      %571 = vxpose.xlu0.b32.cont [13/16] 0.0, 128
      %572 = vxpose.xlu0.b32.cont [14/16] 0.0, 128
      %573 = vxpose.xlu0.b32.cont [15/16] 0.0, 128
      %574 = vxpose.xlu0.b32.end [16/16] 0.0, 128
      %v575 = vpop.trf.xlu0
      %v576 = vpop.trf.xlu0
      %v577 = vpop.trf.xlu0
      %v578 = vpop.trf.xlu0
      %v579 = vpop.trf.xlu0
      %v580 = vpop.trf.xlu0
      %v581 = vpop.trf.xlu0
      %v582 = vpop.trf.xlu0
      %v583 = vpop.trf.xlu0
      %v584 = vpop.trf.xlu0
      %v585 = vpop.trf.xlu0
      %v586 = vpop.trf.xlu0
      %v587 = vpop.trf.xlu0
      %v588 = vpop.trf.xlu0
      %v589 = vpop.trf.xlu0
      %v590 = vpop.trf.xlu0
      %s591 = scalar_lea.vmem %s152, 128
      %592 = vst.msk [vmem:[%s591] sm:$0xff] %vm224, %v575
      %593 = vst.msk [vmem:[%s591 + $0x8] sm:$0xff] %vm224, %v576
      %v594 = vld [vmem:[%s227] ss:$4 sm:$0xf]
      %595 = vxpose.xlu0.b32.start [1/16] %v594, 128
      %596 = vxpose.xlu0.b32.cont [2/16] 0.0, 128
      %597 = vxpose.xlu0.b32.cont [3/16] 0.0, 128
      %598 = vxpose.xlu0.b32.cont [4/16] 0.0, 128
      %599 = vxpose.xlu0.b32.cont [5/16] 0.0, 128
      %600 = vxpose.xlu0.b32.cont [6/16] 0.0, 128
      %601 = vxpose.xlu0.b32.cont [7/16] 0.0, 128
      %602 = vxpose.xlu0.b32.cont [8/16] 0.0, 128
      %603 = vxpose.xlu0.b32.cont [9/16] 0.0, 128
      %604 = vxpose.xlu0.b32.cont [10/16] 0.0, 128
      %605 = vxpose.xlu0.b32.cont [11/16] 0.0, 128
      %606 = vxpose.xlu0.b32.cont [12/16] 0.0, 128
      %607 = vxpose.xlu0.b32.cont [13/16] 0.0, 128
      %608 = vxpose.xlu0.b32.cont [14/16] 0.0, 128
      %609 = vxpose.xlu0.b32.cont [15/16] 0.0, 128
      %610 = vxpose.xlu0.b32.end [16/16] 0.0, 128
      %v611 = vpop.trf.xlu0
      %v612 = vpop.trf.xlu0
      %v613 = vpop.trf.xlu0
      %v614 = vpop.trf.xlu0
      %v615 = vpop.trf.xlu0
      %v616 = vpop.trf.xlu0
      %v617 = vpop.trf.xlu0
      %v618 = vpop.trf.xlu0
      %v619 = vpop.trf.xlu0
      %v620 = vpop.trf.xlu0
      %v621 = vpop.trf.xlu0
      %v622 = vpop.trf.xlu0
      %v623 = vpop.trf.xlu0
      %v624 = vpop.trf.xlu0
      %v625 = vpop.trf.xlu0
      %v626 = vpop.trf.xlu0
      %s627 = scalar_lea.vmem %s152, 144
      %628 = vst.msk [vmem:[%s627] sm:$0xff] %vm224, %v611
      %629 = vst.msk [vmem:[%s627 + $0x8] sm:$0xff] %vm224, %v612
      %v630 = vld [vmem:[%s264] ss:$4 sm:$0xf]
      %631 = vxpose.xlu0.b32.start [1/16] %v630, 128
      %632 = vxpose.xlu0.b32.cont [2/16] 0.0, 128
      %633 = vxpose.xlu0.b32.cont [3/16] 0.0, 128
      %634 = vxpose.xlu0.b32.cont [4/16] 0.0, 128
      %635 = vxpose.xlu0.b32.cont [5/16] 0.0, 128
      %636 = vxpose.xlu0.b32.cont [6/16] 0.0, 128
      %637 = vxpose.xlu0.b32.cont [7/16] 0.0, 128
      %638 = vxpose.xlu0.b32.cont [8/16] 0.0, 128
      %639 = vxpose.xlu0.b32.cont [9/16] 0.0, 128
      %640 = vxpose.xlu0.b32.cont [10/16] 0.0, 128
      %641 = vxpose.xlu0.b32.cont [11/16] 0.0, 128
      %642 = vxpose.xlu0.b32.cont [12/16] 0.0, 128
      %643 = vxpose.xlu0.b32.cont [13/16] 0.0, 128
      %644 = vxpose.xlu0.b32.cont [14/16] 0.0, 128
      %645 = vxpose.xlu0.b32.cont [15/16] 0.0, 128
      %646 = vxpose.xlu0.b32.end [16/16] 0.0, 128
      %v647 = vpop.trf.xlu0
      %v648 = vpop.trf.xlu0
      %v649 = vpop.trf.xlu0
      %v650 = vpop.trf.xlu0
      %v651 = vpop.trf.xlu0
      %v652 = vpop.trf.xlu0
      %v653 = vpop.trf.xlu0
      %v654 = vpop.trf.xlu0
      %v655 = vpop.trf.xlu0
      %v656 = vpop.trf.xlu0
      %v657 = vpop.trf.xlu0
      %v658 = vpop.trf.xlu0
      %v659 = vpop.trf.xlu0
      %v660 = vpop.trf.xlu0
      %v661 = vpop.trf.xlu0
      %v662 = vpop.trf.xlu0
      %s663 = scalar_lea.vmem %s152, 160
      %664 = vst.msk [vmem:[%s663] sm:$0xff] %vm224, %v647
      %665 = vst.msk [vmem:[%s663 + $0x8] sm:$0xff] %vm224, %v648
      %v666 = vld [vmem:[%s301] ss:$4 sm:$0xf]
      %667 = vxpose.xlu0.b32.start [1/16] %v666, 128
      %668 = vxpose.xlu0.b32.cont [2/16] 0.0, 128
      %669 = vxpose.xlu0.b32.cont [3/16] 0.0, 128
      %670 = vxpose.xlu0.b32.cont [4/16] 0.0, 128
      %671 = vxpose.xlu0.b32.cont [5/16] 0.0, 128
      %672 = vxpose.xlu0.b32.cont [6/16] 0.0, 128
      %673 = vxpose.xlu0.b32.cont [7/16] 0.0, 128
      %674 = vxpose.xlu0.b32.cont [8/16] 0.0, 128
      %675 = vxpose.xlu0.b32.cont [9/16] 0.0, 128
      %676 = vxpose.xlu0.b32.cont [10/16] 0.0, 128
      %677 = vxpose.xlu0.b32.cont [11/16] 0.0, 128
      %678 = vxpose.xlu0.b32.cont [12/16] 0.0, 128
      %679 = vxpose.xlu0.b32.cont [13/16] 0.0, 128
      %680 = vxpose.xlu0.b32.cont [14/16] 0.0, 128
      %681 = vxpose.xlu0.b32.cont [15/16] 0.0, 128
      %682 = vxpose.xlu0.b32.end [16/16] 0.0, 128
      %v683 = vpop.trf.xlu0
      %v684 = vpop.trf.xlu0
      %v685 = vpop.trf.xlu0
      %v686 = vpop.trf.xlu0
      %v687 = vpop.trf.xlu0
      %v688 = vpop.trf.xlu0
      %v689 = vpop.trf.xlu0
      %v690 = vpop.trf.xlu0
      %v691 = vpop.trf.xlu0
      %v692 = vpop.trf.xlu0
      %v693 = vpop.trf.xlu0
      %v694 = vpop.trf.xlu0
      %v695 = vpop.trf.xlu0
      %v696 = vpop.trf.xlu0
      %v697 = vpop.trf.xlu0
      %v698 = vpop.trf.xlu0
      %s699 = scalar_lea.vmem %s152, 176
      %700 = vst.msk [vmem:[%s699] sm:$0xff] %vm224, %v683
      %701 = vst.msk [vmem:[%s699 + $0x8] sm:$0xff] %vm224, %v684
      %s702 = scalar_lea.vmem %s143, 3
      %v703 = vld [vmem:[%s702] ss:$4 sm:$0xff]
      %s704 = scalar_lea.vmem %s143, 35
      %v705 = vld [vmem:[%s704] ss:$4 sm:$0xff]
      %706 = vxpose.xlu0.b32.start [1/16] %v703, 128
      %707 = vxpose.xlu0.b32.cont [2/16] %v705, 128
      %708 = vxpose.xlu0.b32.cont [3/16] 0.0, 128
      %709 = vxpose.xlu0.b32.cont [4/16] 0.0, 128
      %710 = vxpose.xlu0.b32.cont [5/16] 0.0, 128
      %711 = vxpose.xlu0.b32.cont [6/16] 0.0, 128
      %712 = vxpose.xlu0.b32.cont [7/16] 0.0, 128
      %713 = vxpose.xlu0.b32.cont [8/16] 0.0, 128
      %714 = vxpose.xlu0.b32.cont [9/16] 0.0, 128
      %715 = vxpose.xlu0.b32.cont [10/16] 0.0, 128
      %716 = vxpose.xlu0.b32.cont [11/16] 0.0, 128
      %717 = vxpose.xlu0.b32.cont [12/16] 0.0, 128
      %718 = vxpose.xlu0.b32.cont [13/16] 0.0, 128
      %719 = vxpose.xlu0.b32.cont [14/16] 0.0, 128
      %720 = vxpose.xlu0.b32.cont [15/16] 0.0, 128
      %721 = vxpose.xlu0.b32.end [16/16] 0.0, 128
      %v722 = vpop.trf.xlu0
      %v723 = vpop.trf.xlu0
      %v724 = vpop.trf.xlu0
      %v725 = vpop.trf.xlu0
      %v726 = vpop.trf.xlu0
      %v727 = vpop.trf.xlu0
      %v728 = vpop.trf.xlu0
      %v729 = vpop.trf.xlu0
      %v730 = vpop.trf.xlu0
      %v731 = vpop.trf.xlu0
      %v732 = vpop.trf.xlu0
      %v733 = vpop.trf.xlu0
      %v734 = vpop.trf.xlu0
      %v735 = vpop.trf.xlu0
      %v736 = vpop.trf.xlu0
      %v737 = vpop.trf.xlu0
      %738 = vst.msk [vmem:[#allocation2] sm:$0xff] %vm188, %v722
      %739 = vst.msk [vmem:[#allocation2 + $0x8] sm:$0xff] %vm188, %v723
      %v740 = vld [vmem:[#allocation2] ss:$4 sm:$0xf]
      %741 = vxpose.xlu0.b32.start [1/16] %v740, 128
      %742 = vxpose.xlu0.b32.cont [2/16] 0.0, 128
      %743 = vxpose.xlu0.b32.cont [3/16] 0.0, 128
      %744 = vxpose.xlu0.b32.cont [4/16] 0.0, 128
      %745 = vxpose.xlu0.b32.cont [5/16] 0.0, 128
      %746 = vxpose.xlu0.b32.cont [6/16] 0.0, 128
      %747 = vxpose.xlu0.b32.cont [7/16] 0.0, 128
      %748 = vxpose.xlu0.b32.cont [8/16] 0.0, 128
      %749 = vxpose.xlu0.b32.cont [9/16] 0.0, 128
      %750 = vxpose.xlu0.b32.cont [10/16] 0.0, 128
      %751 = vxpose.xlu0.b32.cont [11/16] 0.0, 128
      %752 = vxpose.xlu0.b32.cont [12/16] 0.0, 128
      %753 = vxpose.xlu0.b32.cont [13/16] 0.0, 128
      %754 = vxpose.xlu0.b32.cont [14/16] 0.0, 128
      %755 = vxpose.xlu0.b32.cont [15/16] 0.0, 128
      %756 = vxpose.xlu0.b32.end [16/16] 0.0, 128
      %v757 = vpop.trf.xlu0
      %v758 = vpop.trf.xlu0
      %v759 = vpop.trf.xlu0
      %v760 = vpop.trf.xlu0
      %v761 = vpop.trf.xlu0
      %v762 = vpop.trf.xlu0
      %v763 = vpop.trf.xlu0
      %v764 = vpop.trf.xlu0
      %v765 = vpop.trf.xlu0
      %v766 = vpop.trf.xlu0
      %v767 = vpop.trf.xlu0
      %v768 = vpop.trf.xlu0
      %v769 = vpop.trf.xlu0
      %v770 = vpop.trf.xlu0
      %v771 = vpop.trf.xlu0
      %v772 = vpop.trf.xlu0
      %s773 = scalar_lea.vmem %s152, 192
      %774 = vst.msk [vmem:[%s773] sm:$0xff] %vm224, %v757
      %775 = vst.msk [vmem:[%s773 + $0x8] sm:$0xff] %vm224, %v758
      %v776 = vld [vmem:[%s227] ss:$4 sm:$0xf]
      %777 = vxpose.xlu0.b32.start [1/16] %v776, 128
      %778 = vxpose.xlu0.b32.cont [2/16] 0.0, 128
      %779 = vxpose.xlu0.b32.cont [3/16] 0.0, 128
      %780 = vxpose.xlu0.b32.cont [4/16] 0.0, 128
      %781 = vxpose.xlu0.b32.cont [5/16] 0.0, 128
      %782 = vxpose.xlu0.b32.cont [6/16] 0.0, 128
      %783 = vxpose.xlu0.b32.cont [7/16] 0.0, 128
      %784 = vxpose.xlu0.b32.cont [8/16] 0.0, 128
      %785 = vxpose.xlu0.b32.cont [9/16] 0.0, 128
      %786 = vxpose.xlu0.b32.cont [10/16] 0.0, 128
      %787 = vxpose.xlu0.b32.cont [11/16] 0.0, 128
      %788 = vxpose.xlu0.b32.cont [12/16] 0.0, 128
      %789 = vxpose.xlu0.b32.cont [13/16] 0.0, 128
      %790 = vxpose.xlu0.b32.cont [14/16] 0.0, 128
      %791 = vxpose.xlu0.b32.cont [15/16] 0.0, 128
      %792 = vxpose.xlu0.b32.end [16/16] 0.0, 128
      %v793 = vpop.trf.xlu0
      %v794 = vpop.trf.xlu0
      %v795 = vpop.trf.xlu0
      %v796 = vpop.trf.xlu0
      %v797 = vpop.trf.xlu0
      %v798 = vpop.trf.xlu0
      %v799 = vpop.trf.xlu0
      %v800 = vpop.trf.xlu0
      %v801 = vpop.trf.xlu0
      %v802 = vpop.trf.xlu0
      %v803 = vpop.trf.xlu0
      %v804 = vpop.trf.xlu0
      %v805 = vpop.trf.xlu0
      %v806 = vpop.trf.xlu0
      %v807 = vpop.trf.xlu0
      %v808 = vpop.trf.xlu0
      %s809 = scalar_lea.vmem %s152, 208
      %810 = vst.msk [vmem:[%s809] sm:$0xff] %vm224, %v793
      %811 = vst.msk [vmem:[%s809 + $0x8] sm:$0xff] %vm224, %v794
      %v812 = vld [vmem:[%s264] ss:$4 sm:$0xf]
      %813 = vxpose.xlu0.b32.start [1/16] %v812, 128
      %814 = vxpose.xlu0.b32.cont [2/16] 0.0, 128
      %815 = vxpose.xlu0.b32.cont [3/16] 0.0, 128
      %816 = vxpose.xlu0.b32.cont [4/16] 0.0, 128
      %817 = vxpose.xlu0.b32.cont [5/16] 0.0, 128
      %818 = vxpose.xlu0.b32.cont [6/16] 0.0, 128
      %819 = vxpose.xlu0.b32.cont [7/16] 0.0, 128
      %820 = vxpose.xlu0.b32.cont [8/16] 0.0, 128
      %821 = vxpose.xlu0.b32.cont [9/16] 0.0, 128
      %822 = vxpose.xlu0.b32.cont [10/16] 0.0, 128
      %823 = vxpose.xlu0.b32.cont [11/16] 0.0, 128
      %824 = vxpose.xlu0.b32.cont [12/16] 0.0, 128
      %825 = vxpose.xlu0.b32.cont [13/16] 0.0, 128
      %826 = vxpose.xlu0.b32.cont [14/16] 0.0, 128
      %827 = vxpose.xlu0.b32.cont [15/16] 0.0, 128
      %828 = vxpose.xlu0.b32.end [16/16] 0.0, 128
      %v829 = vpop.trf.xlu0
      %v830 = vpop.trf.xlu0
      %v831 = vpop.trf.xlu0
      %v832 = vpop.trf.xlu0
      %v833 = vpop.trf.xlu0
      %v834 = vpop.trf.xlu0
      %v835 = vpop.trf.xlu0
      %v836 = vpop.trf.xlu0
      %v837 = vpop.trf.xlu0
      %v838 = vpop.trf.xlu0
      %v839 = vpop.trf.xlu0
      %v840 = vpop.trf.xlu0
      %v841 = vpop.trf.xlu0
      %v842 = vpop.trf.xlu0
      %v843 = vpop.trf.xlu0
      %v844 = vpop.trf.xlu0
      %s845 = scalar_lea.vmem %s152, 224
      %846 = vst.msk [vmem:[%s845] sm:$0xff] %vm224, %v829
      %847 = vst.msk [vmem:[%s845 + $0x8] sm:$0xff] %vm224, %v830
      %v848 = vld [vmem:[%s301] ss:$4 sm:$0xf]
      %849 = vxpose.xlu0.b32.start [1/16] %v848, 128
      %850 = vxpose.xlu0.b32.cont [2/16] 0.0, 128
      %851 = vxpose.xlu0.b32.cont [3/16] 0.0, 128
      %852 = vxpose.xlu0.b32.cont [4/16] 0.0, 128
      %853 = vxpose.xlu0.b32.cont [5/16] 0.0, 128
      %854 = vxpose.xlu0.b32.cont [6/16] 0.0, 128
      %855 = vxpose.xlu0.b32.cont [7/16] 0.0, 128
      %856 = vxpose.xlu0.b32.cont [8/16] 0.0, 128
      %857 = vxpose.xlu0.b32.cont [9/16] 0.0, 128
      %858 = vxpose.xlu0.b32.cont [10/16] 0.0, 128
      %859 = vxpose.xlu0.b32.cont [11/16] 0.0, 128
      %860 = vxpose.xlu0.b32.cont [12/16] 0.0, 128
      %861 = vxpose.xlu0.b32.cont [13/16] 0.0, 128
      %862 = vxpose.xlu0.b32.cont [14/16] 0.0, 128
      %863 = vxpose.xlu0.b32.cont [15/16] 0.0, 128
      %864 = vxpose.xlu0.b32.end [16/16] 0.0, 128
      %v865 = vpop.trf.xlu0
      %v866 = vpop.trf.xlu0
      %v867 = vpop.trf.xlu0
      %v868 = vpop.trf.xlu0
      %v869 = vpop.trf.xlu0
      %v870 = vpop.trf.xlu0
      %v871 = vpop.trf.xlu0
      %v872 = vpop.trf.xlu0
      %v873 = vpop.trf.xlu0
      %v874 = vpop.trf.xlu0
      %v875 = vpop.trf.xlu0
      %v876 = vpop.trf.xlu0
      %v877 = vpop.trf.xlu0
      %v878 = vpop.trf.xlu0
      %v879 = vpop.trf.xlu0
      %v880 = vpop.trf.xlu0
      %s881 = scalar_lea.vmem %s152, 240
      %882 = vst.msk [vmem:[%s881] sm:$0xff] %vm224, %v865
      %883 = vst.msk [vmem:[%s881 + $0x8] sm:$0xff] %vm224, %v866
      %p884 = scmp.lt.s32.totalorder %s16, 1
      %s885 = scalar_select %p884, %s16, 1
      %p886 = scmp.lt.s32.totalorder %s17, 0
      %s887 = scalar_select %p886, %s17, 0
      %s888 = smul.addr %s887, 2
      %s889 = smul.addr %s885, 32
      %s890 = sadd.s32 %s888, %s889
      %s891 = smul.addr %s890, 8
      %s892 = scalar_lea.vmem %s1, %s891
      // Predicated region
      $region25: #{tpu_custom_call.1} parent=23 // pred_check
        %p893 = pneg %p72
      $region26: #{tpu_custom_call.1} parent=23 // pred_check_branch
        %895 = sbr.rel (%p893) target = $region28
      $region27: #{tpu_custom_call.1} parent=23 // pred_region
        _
      $region28: #{tpu_custom_call.1} parent=23 // pred_fallthru
        _
    $region24: #{tpu_custom_call.1} parent=5 // pred_fallthru
      _
    %p896 = scmp.le.s32.totalorder 2, %s7
    // Predicated region
    $region29: #{tpu_custom_call.1} parent=5 // pred_check
      %p897 = pneg %p896
    $region30: #{tpu_custom_call.1} parent=5 // pred_check_branch
      %899 = sbr.rel (%p897) target = $region32
    $region31: #{tpu_custom_call.1} parent=5 // pred_region
      %s900 = ssub.s32 %s7, 2
      // Predicated region
      $region33: #{tpu_custom_call.1} parent=31 // pred_check
        %p901 = pneg %p78
      $region34: #{tpu_custom_call.1} parent=31 // pred_check_branch
        %903 = sbr.rel (%p901) target = $region36
      $region35: #{tpu_custom_call.1} parent=31 // pred_region
        %p904 = scmp.lt.s32.totalorder %s18, 1
        %s905 = scalar_select %p904, %s18, 1
        %p906 = scmp.lt.s32.totalorder %s19, 0
        %s907 = scalar_select %p906, %s19, 0
        %s908 = smul.addr %s907, 2
        %s909 = smul.addr %s905, 32
        %s910 = sadd.s32 %s908, %s909
        %s911 = smul.addr %s910, 8
        %s912 = scalar_lea.vmem %s1, %s911
      $region36: #{tpu_custom_call.1} parent=31 // pred_fallthru
        _
    $region32: #{tpu_custom_call.1} parent=5 // pred_fallthru
      _
  $region6: #{tpu_custom_call.1} parent=0 // loop_footer
    %s11 = sadd.s32 1, %s7
  $region7: #{tpu_custom_call.1} parent=0 // loop_footer_branch
    %6 = sbr.rel target = $region3
  $region8: #{tpu_custom_call.1} parent=0 // loop_exit
    _

</llo_original>
